<compile_context>
chip_gen: v6e
topology: v6e:2x2x1
jax: 0.10.0
libtpu: 0.0.40
codegen_flags: <defaults>
</compile_context>

<pallas_src>
import functools

import jax
import jax.numpy as jnp
from jax.experimental import pallas as pl
from jax.experimental.pallas import tpu as pltpu


def gesture_mlp_kernel(x_ref, w1_ref, b1_ref, w2_ref, b2_ref, o_ref):
    # fc1: [tm, D_in] @ [D_in, H] + [1, H]  (MXU matmul, f32 accumulate)
    h = jnp.dot(x_ref[...], w1_ref[...], preferred_element_type=jnp.float32)
    # bias + ReLU on the VPU (filler under MXU/DMA slack)
    h = jnp.maximum(h + b1_ref[...], 0.0)
    # fc2: [tm, H] @ [H, C] + [1, C]
    y = jnp.dot(h.astype(w2_ref.dtype), w2_ref[...],
                preferred_element_type=jnp.float32)
    o_ref[...] = (y + b2_ref[...]).astype(o_ref.dtype)


def prepare_params(w1, b1, w2, b2, dtype=jnp.float32):
    """One-time parameter prep (hoisted out of the per-call path).

    Reshapes biases to 2-D rows and optionally casts weights to a compute
    dtype (e.g. bf16 on v6e/v7x).  Biases stay f32 (added post-accumulation).
    """
    return (w1.astype(dtype),
            b1.reshape(1, -1).astype(jnp.float32),
            w2.astype(dtype),
            b2.reshape(1, -1).astype(jnp.float32))


def _round_up(x, m):
    return ((x + m - 1) // m) * m


@functools.partial(jax.jit, static_argnames=("tm_max",))
def gesture_model(x, w1, b1r, w2, b2r, *, tm_max=4096):
    """y = relu(x @ w1 + b1) @ w2 + b2  (PyTorch GestureModel.forward).

    x : [B, D_in]   w1 : [D_in, H]   b1r : [1, H]   w2 : [H, C]   b2r : [1, C]
    (params already processed by prepare_params).
    """
    B, D_in = x.shape
    H = w1.shape[1]
    C = w2.shape[1]

    # Batch tile: multiple of 8 sublanes, large enough to amortize the
    # ~0.35 us/step grid overhead, but capped so that B > 8 always yields a
    # grid with >= 2 steps (two-TC sharding on v7x via "parallel").
    tm = min(tm_max, _round_up(pl.cdiv(B, 2), 8))
    grid = (pl.cdiv(B, tm),)   # partial last block handled by Pallas

    x = x.astype(w1.dtype)  # no-op for the default f32 path

    return pl.pallas_call(
        gesture_mlp_kernel,
        out_shape=jax.ShapeDtypeStruct((B, C), jnp.float32),
        grid=grid,
        in_specs=[
            # x streams through the grid (double-buffered by BlockSpec).
            pl.BlockSpec((tm, D_in), lambda i: (i, 0)),
            # Weights / biases resident in VMEM across all grid steps.
            pl.BlockSpec((D_in, H), lambda i: (0, 0)),
            pl.BlockSpec((1, H), lambda i: (0, 0)),
            pl.BlockSpec((H, C), lambda i: (0, 0)),
            pl.BlockSpec((1, C), lambda i: (0, 0)),
        ],
        # Narrow output block: last dim == full array dim C, so no lane
        # padding and no post-kernel slice; writeback traffic is C*4 B/row.
        out_specs=pl.BlockSpec((tm, C), lambda i: (i, 0)),
        compiler_params=pltpu.CompilerParams(
            dimension_semantics=("parallel",)
        ),
    )(x, w1, b1r, w2, b2r)


if __name__ == "__main__":
    # Shapes consistent with the module: input_size = 32, hidden_size = 128,
    # num_classes = 8.  Batch = 10 (not a multiple of 8) exercises the
    # partial-last-block path and the >=2-step grid.
    B, D_in, H, C = 10, 32, 128, 8

    key = jax.random.PRNGKey(0)
    kx, kw1, kb1, kw2, kb2 = jax.random.split(key, 5)

    x = jax.random.normal(kx, (B, D_in), dtype=jnp.float32)
    # Deterministic parameter init (mimics nn.Linear uniform init scale).
    w1 = jax.random.uniform(kw1, (D_in, H), jnp.float32, -1.0, 1.0) / jnp.sqrt(D_in)
    b1 = jax.random.uniform(kb1, (H,), jnp.float32, -1.0, 1.0) / jnp.sqrt(D_in)
    w2 = jax.random.uniform(kw2, (H, C), jnp.float32, -1.0, 1.0) / jnp.sqrt(H)
    b2 = jax.random.uniform(kb2, (C,), jnp.float32, -1.0, 1.0) / jnp.sqrt(H)

    # One-time parameter prep ("model init"), outside the forward call path.
    params = prepare_params(w1, b1, w2, b2)

    out = gesture_model(x, *params)
    jax.block_until_ready(out)

    # Pure-JAX reference check (f32 path -> tight tolerance).
    ref = jnp.maximum(x @ w1 + b1, 0.0) @ w2 + b2
    assert out.shape == (B, C)
    assert jnp.allclose(out, ref, atol=1e-5, rtol=1e-5)

    print("KERNEL_OK")
</pallas_src>

<mosaic_0001>
module attributes {stable_mosaic.version = 11 : i64} {
  func.func @gesture_mlp_kernel(%arg0: i32, %arg1: memref<8x32xf32, #tpu.memory_space<vmem>>, %arg2: memref<32x128xf32, #tpu.memory_space<vmem>>, %arg3: memref<1x128xf32, #tpu.memory_space<vmem>>, %arg4: memref<128x8xf32, #tpu.memory_space<vmem>>, %arg5: memref<1x8xf32, #tpu.memory_space<vmem>>, %arg6: memref<8x8xf32, #tpu.memory_space<vmem>>) attributes {dimension_semantics = [#tpu.dimension_semantics<parallel>], iteration_bounds = array<i64: 2>, scalar_prefetch = 0 : i64, scratch_operands = 0 : i64, tpu.core_type = #tpu.core_type<tc>, window_params = [{transform_indices = @transform_0, window_bounds = array<i64: 8, 32>}, {pipeline_mode = #tpu.pipeline_mode<synchronous>, transform_indices = @transform_1, window_bounds = array<i64: 32, 128>}, {pipeline_mode = #tpu.pipeline_mode<synchronous>, transform_indices = @transform_2, window_bounds = array<i64: 1, 128>}, {pipeline_mode = #tpu.pipeline_mode<synchronous>, transform_indices = @transform_3, window_bounds = array<i64: 128, 8>}, {pipeline_mode = #tpu.pipeline_mode<synchronous>, transform_indices = @transform_4, window_bounds = array<i64: 1, 8>}, {transform_indices = @transform_5, window_bounds = array<i64: 8, 8>}]} {
    %c0 = arith.constant 0 : index
    %c0_0 = arith.constant 0 : index
    %0 = vector.load %arg1[%c0, %c0_0] : memref<8x32xf32, #tpu.memory_space<vmem>>, vector<8x32xf32>
    %c0_1 = arith.constant 0 : index
    %c0_2 = arith.constant 0 : index
    %1 = vector.load %arg2[%c0_1, %c0_2] : memref<32x128xf32, #tpu.memory_space<vmem>>, vector<32x128xf32>
    %cst = arith.constant dense<0.000000e+00> : vector<8x128xf32>
    %2 = tpu.matmul %0, %1, %cst {dimension_numbers = #tpu.dot_dimension_numbers<[1], [0], [0], [1], [0, 0, 1, 1], [], []>} : vector<8x32xf32>, vector<32x128xf32>, vector<8x128xf32> -> vector<8x128xf32>
    %c0_3 = arith.constant 0 : index
    %c0_4 = arith.constant 0 : index
    %3 = vector.load %arg3[%c0_3, %c0_4] : memref<1x128xf32, #tpu.memory_space<vmem>>, vector<1x128xf32>
    %4 = vector.broadcast %3 : vector<1x128xf32> to vector<8x128xf32>
    %5 = arith.addf %2, %4 : vector<8x128xf32>
    %cst_5 = arith.constant 0.000000e+00 : f32
    %6 = vector.broadcast %cst_5 : f32 to vector<8x128xf32>
    %7 = arith.maximumf %5, %6 : vector<8x128xf32>
    %c0_6 = arith.constant 0 : index
    %c0_7 = arith.constant 0 : index
    %8 = vector.load %arg4[%c0_6, %c0_7] : memref<128x8xf32, #tpu.memory_space<vmem>>, vector<128x8xf32>
    %cst_8 = arith.constant dense<0.000000e+00> : vector<8x8xf32>
    %9 = tpu.matmul %7, %8, %cst_8 {dimension_numbers = #tpu.dot_dimension_numbers<[1], [0], [0], [1], [0, 0, 1, 1], [], []>} : vector<8x128xf32>, vector<128x8xf32>, vector<8x8xf32> -> vector<8x8xf32>
    %c0_9 = arith.constant 0 : index
    %c0_10 = arith.constant 0 : index
    %10 = vector.load %arg5[%c0_9, %c0_10] : memref<1x8xf32, #tpu.memory_space<vmem>>, vector<1x8xf32>
    %11 = vector.broadcast %10 : vector<1x8xf32> to vector<8x8xf32>
    %12 = arith.addf %9, %11 : vector<8x8xf32>
    %c0_11 = arith.constant 0 : index
    %c0_12 = arith.constant 0 : index
    %13 = vector.load %arg6[%c0_11, %c0_12] : memref<8x8xf32, #tpu.memory_space<vmem>>, vector<8x8xf32>
    tpu.vector_store %arg6[%c0_11, %c0_12], %12 {strides = array<i32>} : memref<8x8xf32, #tpu.memory_space<vmem>>, vector<8x8xf32>,
    return
  }
  func.func @transform_0(%arg0: i32) -> (i32, i32) {
    %c0_i32 = arith.constant 0 : i32
    %c0_i32_0 = arith.constant 0 : i32
    return %arg0, %c0_i32 : i32, i32
  }
  func.func @transform_1(%arg0: i32) -> (i32, i32) {
    %c0_i32 = arith.constant 0 : i32
    %c0_i32_0 = arith.constant 0 : i32
    %c0_i32_1 = arith.constant 0 : i32
    return %c0_i32, %c0_i32_0 : i32, i32
  }
  func.func @transform_2(%arg0: i32) -> (i32, i32) {
    %c0_i32 = arith.constant 0 : i32
    %c0_i32_0 = arith.constant 0 : i32
    %c0_i32_1 = arith.constant 0 : i32
    return %c0_i32, %c0_i32_0 : i32, i32
  }
  func.func @transform_3(%arg0: i32) -> (i32, i32) {
    %c0_i32 = arith.constant 0 : i32
    %c0_i32_0 = arith.constant 0 : i32
    %c0_i32_1 = arith.constant 0 : i32
    return %c0_i32, %c0_i32_0 : i32, i32
  }
  func.func @transform_4(%arg0: i32) -> (i32, i32) {
    %c0_i32 = arith.constant 0 : i32
    %c0_i32_0 = arith.constant 0 : i32
    %c0_i32_1 = arith.constant 0 : i32
    return %c0_i32, %c0_i32_0 : i32, i32
  }
  func.func @transform_5(%arg0: i32) -> (i32, i32) {
    %c0_i32 = arith.constant 0 : i32
    %c0_i32_0 = arith.constant 0 : i32
    return %arg0, %c0_i32 : i32, i32
  }
}

</mosaic_0001>

<llo_original>
// kernel: gesture_model.1
$region0: #{gesture_model.1}
  #allocation0 [shape = 'u32[]', space=smem, size = 0x4, offset = 0x4, fixed_abs, tag = 'smem constant byte address 0x4 - core index']
  #allocation1 [shape = 'u32[144,128]{1,0:T(1,128)}', space=vmem, size = 0x12000, scoped, tag = 'internal scratch']
  %s0 = inlined_call_operand.vmem [shape: f32[10,32], index: 0, kind: input, shape index: {}]
  %s1 = inlined_call_operand.vmem [shape: f32[32,128], index: 1, kind: input, shape index: {}]
  %s2 = inlined_call_operand.vmem [shape: f32[1,128], index: 2, kind: input, shape index: {}]
  %s3 = inlined_call_operand.vmem [shape: f32[128,8], index: 3, kind: input, shape index: {}]
  %s4 = inlined_call_operand.vmem [shape: f32[1,8], index: 4, kind: input, shape index: {}]
  %s5 = inlined_call_operand.vmem [shape: f32[10,8], index: 5, kind: output, shape index: {}]
  %s6 = sld [smem:[#allocation0]]
  $region53: #{gesture_model.1} parent=0
    _
  %s8 = ssub.s32 1, %s6
  %s9 = scalar_select 0, %s8, %s6
  loop: start=0, step=1, limit=4
  $region2: #{gesture_model.1} parent=0 // loop_pre_header
    _
  $region3: #{gesture_model.1} parent=0 // loop_header
    %s11 = sphi 0, %s15
    %p12 = scmp.ge.s32.totalorder %s11, 4
    %s21 = sphi 0, %s23
    %s24 = sphi 0, %s21
    %s25 = sphi 0, %s24
    %s41 = sphi 0, %s25
    %s45 = sphi 0, %s45
    %s47 = sphi 0, %s45
    %s48 = sphi 0, %s47
    %s62 = sphi 0, %s48
    %s66 = sphi 0, %s66
    %s68 = sphi 0, %s66
    %s69 = sphi 0, %s68
    %s83 = sphi 0, %s69
    %s87 = sphi 0, %s87
    %s89 = sphi 0, %s87
    %s90 = sphi 0, %s89
    %s104 = sphi 0, %s90
    %s108 = sphi 0, %s108
    %s110 = sphi 0, %s108
    %s111 = sphi 0, %s110
    %s125 = sphi 0, %s111
    %s131 = sphi 0, %s133
    %s134 = sphi 0, %s131
    %s135 = sphi 0, %s134
    %s151 = sphi 0, %s135
  $region4: #{gesture_model.1} parent=0 // loop_header_branch
    %14 = sbr.rel (%p12) target = $region8
  $region5: #{gesture_model.1} parent=0 // loop_body
    %s16 = ssub.s32 %s11, 1
    %s17 = ssub.s32 %s11, 2
    %s18 = sadd.s32 %s11, 1
    %s19 = ssub.s32 %s11, %s18
    %p20 = scmp.eq.s32.totalorder %s19, 0
    %s22 = sadd.s32 %s21, 1
    %s23 = scalar_select %p20, %s21, %s22
    %p26 = pneg %p20
    %p27 = scmp.eq.s32.totalorder %s11, 1
    %p28 = por %p26, %p27
    %p29 = scmp.ne.s32.totalorder %s21, %s24
    %p30 = scmp.eq.s32.totalorder %s11, 0
    %p31 = por %p29, %p30
    %p32 = scmp.ne.s32.totalorder %s21, %s24
    %p33 = scmp.eq.s32.totalorder %s16, 1
    %p34 = por %p32, %p33
    %p35 = scmp.ne.s32.totalorder %s24, %s25
    %p36 = scmp.eq.s32.totalorder %s16, 0
    %p37 = por %p35, %p36
    %p38 = scmp.ne.s32.totalorder %s24, %s25
    %p39 = scmp.eq.s32.totalorder %s17, 1
    %p40 = por %p38, %p39
    %p42 = scmp.ne.s32.totalorder %s25, %s41
    %p43 = scmp.eq.s32.totalorder %s17, 0
    %p44 = por %p42, %p43
    %s46 = sadd.s32 %s45, 1
    %p49 = scmp.eq.s32.totalorder %s11, 1
    %p50 = scmp.ne.s32.totalorder %s45, %s47
    %p51 = scmp.eq.s32.totalorder %s11, 0
    %p52 = por %p50, %p51
    %p53 = scmp.ne.s32.totalorder %s45, %s47
    %p54 = scmp.eq.s32.totalorder %s16, 1
    %p55 = por %p53, %p54
    %p56 = scmp.ne.s32.totalorder %s47, %s48
    %p57 = scmp.eq.s32.totalorder %s16, 0
    %p58 = por %p56, %p57
    %p59 = scmp.ne.s32.totalorder %s47, %s48
    %p60 = scmp.eq.s32.totalorder %s17, 1
    %p61 = por %p59, %p60
    %p63 = scmp.ne.s32.totalorder %s48, %s62
    %p64 = scmp.eq.s32.totalorder %s17, 0
    %p65 = por %p63, %p64
    %s67 = sadd.s32 %s66, 1
    %p70 = scmp.eq.s32.totalorder %s11, 1
    %p71 = scmp.ne.s32.totalorder %s66, %s68
    %p72 = scmp.eq.s32.totalorder %s11, 0
    %p73 = por %p71, %p72
    %p74 = scmp.ne.s32.totalorder %s66, %s68
    %p75 = scmp.eq.s32.totalorder %s16, 1
    %p76 = por %p74, %p75
    %p77 = scmp.ne.s32.totalorder %s68, %s69
    %p78 = scmp.eq.s32.totalorder %s16, 0
    %p79 = por %p77, %p78
    %p80 = scmp.ne.s32.totalorder %s68, %s69
    %p81 = scmp.eq.s32.totalorder %s17, 1
    %p82 = por %p80, %p81
    %p84 = scmp.ne.s32.totalorder %s69, %s83
    %p85 = scmp.eq.s32.totalorder %s17, 0
    %p86 = por %p84, %p85
    %s88 = sadd.s32 %s87, 1
    %p91 = scmp.eq.s32.totalorder %s11, 1
    %p92 = scmp.ne.s32.totalorder %s87, %s89
    %p93 = scmp.eq.s32.totalorder %s11, 0
    %p94 = por %p92, %p93
    %p95 = scmp.ne.s32.totalorder %s87, %s89
    %p96 = scmp.eq.s32.totalorder %s16, 1
    %p97 = por %p95, %p96
    %p98 = scmp.ne.s32.totalorder %s89, %s90
    %p99 = scmp.eq.s32.totalorder %s16, 0
    %p100 = por %p98, %p99
    %p101 = scmp.ne.s32.totalorder %s89, %s90
    %p102 = scmp.eq.s32.totalorder %s17, 1
    %p103 = por %p101, %p102
    %p105 = scmp.ne.s32.totalorder %s90, %s104
    %p106 = scmp.eq.s32.totalorder %s17, 0
    %p107 = por %p105, %p106
    %s109 = sadd.s32 %s108, 1
    %p112 = scmp.eq.s32.totalorder %s11, 1
    %p113 = scmp.ne.s32.totalorder %s108, %s110
    %p114 = scmp.eq.s32.totalorder %s11, 0
    %p115 = por %p113, %p114
    %p116 = scmp.ne.s32.totalorder %s108, %s110
    %p117 = scmp.eq.s32.totalorder %s16, 1
    %p118 = por %p116, %p117
    %p119 = scmp.ne.s32.totalorder %s110, %s111
    %p120 = scmp.eq.s32.totalorder %s16, 0
    %p121 = por %p119, %p120
    %p122 = scmp.ne.s32.totalorder %s110, %s111
    %p123 = scmp.eq.s32.totalorder %s17, 1
    %p124 = por %p122, %p123
    %p126 = scmp.ne.s32.totalorder %s111, %s125
    %p127 = scmp.eq.s32.totalorder %s17, 0
    %p128 = por %p126, %p127
    %s129 = ssub.s32 %s11, %s18
    %p130 = scmp.eq.s32.totalorder %s129, 0
    %s132 = sadd.s32 %s131, 1
    %s133 = scalar_select %p130, %s131, %s132
    %p136 = pneg %p130
    %p137 = scmp.eq.s32.totalorder %s11, 1
    %p138 = por %p136, %p137
    %p139 = scmp.ne.s32.totalorder %s131, %s134
    %p140 = scmp.eq.s32.totalorder %s11, 0
    %p141 = por %p139, %p140
    %p142 = scmp.ne.s32.totalorder %s131, %s134
    %p143 = scmp.eq.s32.totalorder %s16, 1
    %p144 = por %p142, %p143
    %p145 = scmp.ne.s32.totalorder %s134, %s135
    %p146 = scmp.eq.s32.totalorder %s16, 0
    %p147 = por %p145, %p146
    %p148 = scmp.ne.s32.totalorder %s134, %s135
    %p149 = scmp.eq.s32.totalorder %s17, 1
    %p150 = por %p148, %p149
    %p152 = scmp.ne.s32.totalorder %s135, %s151
    %p153 = scmp.eq.s32.totalorder %s17, 0
    %p154 = por %p152, %p153
    %p155 = scmp.le.s32.totalorder 1, %s11
    %p156 = scmp.lt.s32.totalorder %s11, 3
    %p157 = pnand %p155, %p156
    %p158 = pneg %p157
    // Predicated region
    $region9: #{gesture_model.1} parent=5 // pred_check
      _
    $region10: #{gesture_model.1} parent=5 // pred_check_branch
      %160 = sbr.rel (%p157) target = $region12
    $region11: #{gesture_model.1} parent=5 // pred_region
      %s161 = ssub.s32 %s11, 1
      // Predicated region
      $region13: #{gesture_model.1} parent=11 // pred_check
        %p162 = pneg %p58
      $region14: #{gesture_model.1} parent=11 // pred_check_branch
        %164 = sbr.rel (%p162) target = $region16
      $region15: #{gesture_model.1} parent=11 // pred_region
        _
      $region16: #{gesture_model.1} parent=11 // pred_fallthru
        _
      // Predicated region
      $region17: #{gesture_model.1} parent=11 // pred_check
        %p165 = pneg %p79
      $region18: #{gesture_model.1} parent=11 // pred_check_branch
        %167 = sbr.rel (%p165) target = $region20
      $region19: #{gesture_model.1} parent=11 // pred_region
        _
      $region20: #{gesture_model.1} parent=11 // pred_fallthru
        _
      // Predicated region
      $region21: #{gesture_model.1} parent=11 // pred_check
        %p168 = pneg %p100
      $region22: #{gesture_model.1} parent=11 // pred_check_branch
        %170 = sbr.rel (%p168) target = $region24
      $region23: #{gesture_model.1} parent=11 // pred_region
        _
      $region24: #{gesture_model.1} parent=11 // pred_fallthru
        _
      // Predicated region
      $region25: #{gesture_model.1} parent=11 // pred_check
        %p171 = pneg %p121
      $region26: #{gesture_model.1} parent=11 // pred_check_branch
        %173 = sbr.rel (%p171) target = $region28
      $region27: #{gesture_model.1} parent=11 // pred_region
        _
      $region28: #{gesture_model.1} parent=11 // pred_fallthru
        _
    $region12: #{gesture_model.1} parent=5 // pred_fallthru
      _
    %p174 = scmp.lt.s32.totalorder %s11, 2
    // Predicated region
    $region29: #{gesture_model.1} parent=5 // pred_check
      %p175 = pneg %p174
    $region30: #{gesture_model.1} parent=5 // pred_check_branch
      %177 = sbr.rel (%p175) target = $region32
    $region31: #{gesture_model.1} parent=5 // pred_region
      // Predicated region
      $region33: #{gesture_model.1} parent=31 // pred_check
        %p178 = pneg %p31
      $region34: #{gesture_model.1} parent=31 // pred_check_branch
        %180 = sbr.rel (%p178) target = $region36
      $region35: #{gesture_model.1} parent=31 // pred_region
        %p181 = scmp.lt.s32.totalorder %s11, 1
        %s182 = scalar_select %p181, %s11, 1
        %s183 = smul.addr %s182, 8
        %s184 = scalar_lea.vmem %s0, %s183
      $region36: #{gesture_model.1} parent=31 // pred_fallthru
        _
    $region32: #{gesture_model.1} parent=5 // pred_fallthru
      _
    %p185 = scmp.le.s32.totalorder 1, %s11
    %p186 = scmp.lt.s32.totalorder %s11, 3
    %p187 = pnand %p185, %p186
    %p188 = pneg %p187
    // Predicated region
    $region37: #{gesture_model.1} parent=5 // pred_check
      _
    $region38: #{gesture_model.1} parent=5 // pred_check_branch
      %190 = sbr.rel (%p187) target = $region40
    $region39: #{gesture_model.1} parent=5 // pred_region
      %s191 = ssub.s32 %s11, 1
      %p192 = scmp.lt.s32.totalorder %s16, 1
      %s193 = scalar_select %p192, %s16, 1
      %s194 = smul.addr %s193, 8
      %s195 = scalar_lea.vmem %s0, %s194
      %p196 = pneg %p37
      %p197 = pneg %p34
      %p198 = pneg %p58
      %p199 = pneg %p55
      %p200 = pneg %p79
      %p201 = pneg %p76
      %p202 = pneg %p100
      %p203 = pneg %p97
      %p204 = pneg %p121
      %p205 = pneg %p118
      %p206 = pneg %p147
      %p207 = pneg %p144
      %p208 = scmp.lt.s32.totalorder %s16, 1
      %s209 = scalar_select %p208, %s16, 1
      %s210 = smul.addr %s209, 8
      %s211 = scalar_lea.vmem %s5, %s210
      %p212 = scmp.lt.s32.totalorder %s16, 1
      %s213 = scalar_select %p212, %s16, 1
      %s214 = smul.addr %s213, 8
      %s215 = scalar_lea.vmem %s0, %s214
      %p216 = scmp.lt.s32.totalorder %s16, 1
      %s217 = scalar_select %p216, %s16, 1
      %s218 = smul.addr %s217, 8
      %s219 = scalar_lea.vmem %s5, %s218
      %v220 = vld [vmem:[%s215] sm:$0xff]
      %v221 = vld [vmem:[%s1] sm:$0xff]
      %v222 = vld [vmem:[%s1 + $0x8] sm:$0xff]
      %v223 = vld [vmem:[%s1 + $0x10] sm:$0xff]
      %v224 = vld [vmem:[%s1 + $0x18] sm:$0xff]
      %v225 = vld [vmem:[%s2] sm:$0x1]
      %v227 = vlaneseq
      %v228 = vshrl.u32 %v227, 7
      %v229 = vsub.s32 0, %v228
      %v230 = vrot.slane %v225, %v229
      %vm232 = vcmask 261120
      %v234 = vsel %vm232, %v220, 0
      %236 = vmatprep.subr.mxu0 0.0
      %237 = vmatpush1.msra.mxu0 0.0
      %238 = vmatprep.subr.mxu0 0.0
      %239 = vmatpush1.msra.mxu0 0.0
      %240 = vmatprep.subr.mxu0 0.0
      %241 = vmatpush1.msra.mxu0 0.0
      %242 = vmatprep.subr.mxu0 0.0
      %243 = vmatpush1.msra.mxu0 0.0
      %244 = vmatprep.subr.mxu0 0.0
      %245 = vmatpush1.msra.mxu0 0.0
      %246 = vmatprep.subr.mxu0 0.0
      %247 = vmatpush1.msra.mxu0 0.0
      %248 = vmatprep.subr.mxu0 0.0
      %249 = vmatpush1.msra.mxu0 0.0
      %250 = vmatprep.subr.mxu0 0.0
      %251 = vmatpush1.msra.mxu0 0.0
      %252 = vmatprep.subr.mxu0 0.0
      %253 = vmatpush1.msra.mxu0 0.0
      %254 = vmatprep.subr.mxu0 0.0
      %255 = vmatpush1.msra.mxu0 0.0
      %256 = vmatprep.subr.mxu0 0.0
      %257 = vmatpush1.msra.mxu0 0.0
      %258 = vmatprep.subr.mxu0 0.0
      %259 = vmatpush1.msra.mxu0 0.0
      %260 = vmatprep.subr.mxu0 0.0
      %261 = vmatpush1.msra.mxu0 %v224
      %262 = vmatprep.subr.mxu0 0.0
      %263 = vmatpush1.msra.mxu0 %v223
      %264 = vmatprep.subr.mxu0 0.0
      %265 = vmatpush1.msra.mxu0 %v222
      %266 = vmatprep.subr.mxu0 0.0
      %267 = vmatpush1.msra.mxu0 %v221
      %268 = vmatprep.subr.mxu0 0.0
      %269 = vmatpush2.msra.mxu0 0.0
      %270 = vmatprep.subr.mxu0 0.0
      %271 = vmatpush2.msra.mxu0 0.0
      %272 = vmatprep.subr.mxu0 0.0
      %273 = vmatpush2.msra.mxu0 0.0
      %274 = vmatprep.subr.mxu0 0.0
      %275 = vmatpush2.msra.mxu0 0.0
      %276 = vmatprep.subr.mxu0 0.0
      %277 = vmatpush2.msra.mxu0 0.0
      %278 = vmatprep.subr.mxu0 0.0
      %279 = vmatpush2.msra.mxu0 0.0
      %280 = vmatprep.subr.mxu0 0.0
      %281 = vmatpush2.msra.mxu0 0.0
      %282 = vmatprep.subr.mxu0 0.0
      %283 = vmatpush2.msra.mxu0 0.0
      %284 = vmatprep.subr.mxu0 0.0
      %285 = vmatpush2.msra.mxu0 0.0
      %286 = vmatprep.subr.mxu0 0.0
      %287 = vmatpush2.msra.mxu0 0.0
      %288 = vmatprep.subr.mxu0 0.0
      %289 = vmatpush2.msra.mxu0 0.0
      %290 = vmatprep.subr.mxu0 0.0
      %291 = vmatpush2.msra.mxu0 0.0
      %292 = vmatprep.subr.mxu0 0.0
      %293 = vmatpush2.msra.mxu0 0.0
      %294 = vmatprep.subr.mxu0 0.0
      %295 = vmatpush2.msra.mxu0 0.0
      %296 = vmatprep.subr.mxu0 0.0
      %297 = vmatpush2.msra.mxu0 0.0
      %298 = vmatprep.subr.mxu0 0.0
      %299 = vmatpush2.msra.mxu0 0.0
      %300 = vmatprep.mubr.f32.mxu0 0.0
      %301 = vmatmul.mubr.f32.gmra.mxu0 %v234
      %v302 = vpop.f32.mrf.mxu0
      %v303 = vadd.f32 %v230, %v302
      %v304 = vpop.f32.mrf.mxu0
      %305 = vdwg.mxu0
      %v306 = vmax.f32 %v303, 0.0
      %v307 = vld [vmem:[%s3] sm:$0xff]
      %v308 = vld [vmem:[%s3 + $0x8] sm:$0xff]
      %v309 = vld [vmem:[%s3 + $0x10] sm:$0xff]
      %v310 = vld [vmem:[%s3 + $0x18] sm:$0xff]
      %v311 = vld [vmem:[%s3 + $0x20] sm:$0xff]
      %v312 = vld [vmem:[%s3 + $0x28] sm:$0xff]
      %v313 = vld [vmem:[%s3 + $0x30] sm:$0xff]
      %v314 = vld [vmem:[%s3 + $0x38] sm:$0xff]
      %v315 = vld [vmem:[%s3 + $0x40] sm:$0xff]
      %v316 = vld [vmem:[%s3 + $0x48] sm:$0xff]
      %v317 = vld [vmem:[%s3 + $0x50] sm:$0xff]
      %v318 = vld [vmem:[%s3 + $0x58] sm:$0xff]
      %v319 = vld [vmem:[%s3 + $0x60] sm:$0xff]
      %v320 = vld [vmem:[%s3 + $0x68] sm:$0xff]
      %v321 = vld [vmem:[%s3 + $0x70] sm:$0xff]
      %v322 = vld [vmem:[%s3 + $0x78] sm:$0xff]
      %v323 = vld [vmem:[%s4] sm:$0x1]
      %v325 = vlaneseq
      %v326 = vshrl.u32 %v325, 7
      %v327 = vsub.s32 0, %v326
      %v328 = vrot.slane %v323, %v327
      %330 = vmatprep.subr.mxu0 0.0
      %331 = vmatpush1.msra.mxu0 %v322
      %332 = vmatprep.subr.mxu0 0.0
      %333 = vmatpush1.msra.mxu0 %v321
      %334 = vmatprep.subr.mxu0 0.0
      %335 = vmatpush1.msra.mxu0 %v320
      %336 = vmatprep.subr.mxu0 0.0
      %337 = vmatpush1.msra.mxu0 %v319
      %338 = vmatprep.subr.mxu0 0.0
      %339 = vmatpush1.msra.mxu0 %v318
      %340 = vmatprep.subr.mxu0 0.0
      %341 = vmatpush1.msra.mxu0 %v317
      %342 = vmatprep.subr.mxu0 0.0
      %343 = vmatpush1.msra.mxu0 %v316
      %344 = vmatprep.subr.mxu0 0.0
      %345 = vmatpush1.msra.mxu0 %v315
      %346 = vmatprep.subr.mxu0 0.0
      %347 = vmatpush1.msra.mxu0 %v314
      %348 = vmatprep.subr.mxu0 0.0
      %349 = vmatpush1.msra.mxu0 %v313
      %350 = vmatprep.subr.mxu0 0.0
      %351 = vmatpush1.msra.mxu0 %v312
      %352 = vmatprep.subr.mxu0 0.0
      %353 = vmatpush1.msra.mxu0 %v311
      %354 = vmatprep.subr.mxu0 0.0
      %355 = vmatpush1.msra.mxu0 %v310
      %356 = vmatprep.subr.mxu0 0.0
      %357 = vmatpush1.msra.mxu0 %v309
      %358 = vmatprep.subr.mxu0 0.0
      %359 = vmatpush1.msra.mxu0 %v308
      %360 = vmatprep.subr.mxu0 0.0
      %361 = vmatpush1.msra.mxu0 %v307
      %362 = vmatprep.subr.mxu0 0.0
      %363 = vmatpush2.msra.mxu0 0.0
      %364 = vmatprep.subr.mxu0 0.0
      %365 = vmatpush2.msra.mxu0 0.0
      %366 = vmatprep.subr.mxu0 0.0
      %367 = vmatpush2.msra.mxu0 0.0
      %368 = vmatprep.subr.mxu0 0.0
      %369 = vmatpush2.msra.mxu0 0.0
      %370 = vmatprep.subr.mxu0 0.0
      %371 = vmatpush2.msra.mxu0 0.0
      %372 = vmatprep.subr.mxu0 0.0
      %373 = vmatpush2.msra.mxu0 0.0
      %374 = vmatprep.subr.mxu0 0.0
      %375 = vmatpush2.msra.mxu0 0.0
      %376 = vmatprep.subr.mxu0 0.0
      %377 = vmatpush2.msra.mxu0 0.0
      %378 = vmatprep.subr.mxu0 0.0
      %379 = vmatpush2.msra.mxu0 0.0
      %380 = vmatprep.subr.mxu0 0.0
      %381 = vmatpush2.msra.mxu0 0.0
      %382 = vmatprep.subr.mxu0 0.0
      %383 = vmatpush2.msra.mxu0 0.0
      %384 = vmatprep.subr.mxu0 0.0
      %385 = vmatpush2.msra.mxu0 0.0
      %386 = vmatprep.subr.mxu0 0.0
      %387 = vmatpush2.msra.mxu0 0.0
      %388 = vmatprep.subr.mxu0 0.0
      %389 = vmatpush2.msra.mxu0 0.0
      %390 = vmatprep.subr.mxu0 0.0
      %391 = vmatpush2.msra.mxu0 0.0
      %392 = vmatprep.subr.mxu0 0.0
      %393 = vmatpush2.msra.mxu0 0.0
      %394 = vmatprep.mubr.f32.mxu0 0.0
      %395 = vmatmul.mubr.f32.gmra.mxu0 %v306
      %v396 = vpop.f32.mrf.mxu0
      %v397 = vadd.f32 %v328, %v396
      %v398 = vpop.f32.mrf.mxu0
      %399 = vdwg.mxu0
      %vm400 = vcmask 64512
      %401 = vst.msk [vmem:[%s219] sm:$0xff] %vm400, %v397
      %p402 = scmp.lt.s32.totalorder %s16, 1
      %s403 = scalar_select %p402, %s16, 1
      %s404 = smul.addr %s403, 8
      %s405 = scalar_lea.vmem %s5, %s404
      // Predicated region
      $region41: #{gesture_model.1} parent=39 // pred_check
        %p406 = pneg %p144
      $region42: #{gesture_model.1} parent=39 // pred_check_branch
        %408 = sbr.rel (%p406) target = $region44
      $region43: #{gesture_model.1} parent=39 // pred_region
        _
      $region44: #{gesture_model.1} parent=39 // pred_fallthru
        _
    $region40: #{gesture_model.1} parent=5 // pred_fallthru
      _
    %p409 = scmp.le.s32.totalorder 2, %s11
    // Predicated region
    $region45: #{gesture_model.1} parent=5 // pred_check
      %p410 = pneg %p409
    $region46: #{gesture_model.1} parent=5 // pred_check_branch
      %412 = sbr.rel (%p410) target = $region48
    $region47: #{gesture_model.1} parent=5 // pred_region
      %s413 = ssub.s32 %s11, 2
      // Predicated region
      $region49: #{gesture_model.1} parent=47 // pred_check
        %p414 = pneg %p150
      $region50: #{gesture_model.1} parent=47 // pred_check_branch
        %416 = sbr.rel (%p414) target = $region52
      $region51: #{gesture_model.1} parent=47 // pred_region
        %p417 = scmp.lt.s32.totalorder %s17, 1
        %s418 = scalar_select %p417, %s17, 1
        %s419 = smul.addr %s418, 8
        %s420 = scalar_lea.vmem %s5, %s419
      $region52: #{gesture_model.1} parent=47 // pred_fallthru
        _
    $region48: #{gesture_model.1} parent=5 // pred_fallthru
      _
  $region6: #{gesture_model.1} parent=0 // loop_footer
    %s15 = sadd.s32 1, %s11
  $region7: #{gesture_model.1} parent=0 // loop_footer_branch
    %10 = sbr.rel target = $region3
  $region8: #{gesture_model.1} parent=0 // loop_exit
    _

</llo_original>
